<compile_context>
chip_gen: v7x
topology: tpu7x:2x2x1
jax: 0.10.0
libtpu: 0.0.40
codegen_flags: <defaults>
</compile_context>

<pallas_src>
import functools

import jax
import jax.numpy as jnp
from jax.experimental import pallas as pl
from jax.experimental.pallas import tpu as pltpu


def _round_up(x, m):
    return ((x + m - 1) // m) * m


# ----------------------------------------------------------------------------
# Pass 1: per-metapath partial column sums of tanh(E_p @ W^T + b).
# Grid = (P, row_tiles); the row-tile axis is the reduction axis (last,
# "arbitrary") and the (1, 8, D) output block stays resident across it.
# ----------------------------------------------------------------------------
def _score_sum_kernel(e_ref, wt_ref, b_ref, o_ref, *, tile_rows, n_real):
    t = pl.program_id(1)
    nt = pl.num_programs(1)

    @pl.when(t == 0)
    def _():
        o_ref[...] = jnp.zeros_like(o_ref)

    # [TM, D] f32 @ [D, D] f32 -> f32 on the MXU; f32 elementwise tanh.
    x = jnp.dot(e_ref[0], wt_ref[...], preferred_element_type=jnp.float32)
    sp = jnp.tanh(x + b_ref[...])                                    # [TM, D]

    # Only the last row tile can contain rows past N (stale VMEM from the
    # boundary DMA); keep the hot path mask-free.
    @pl.when(t < nt - 1)
    def _():
        o_ref[...] += sp.reshape(tile_rows // 8, 8, -1).sum(axis=0)[None]

    @pl.when(t == nt - 1)
    def _():
        row = t * tile_rows + jax.lax.broadcasted_iota(jnp.int32, sp.shape, 0)
        spm = jnp.where(row < n_real, sp, 0.0)
        o_ref[...] += spm.reshape(tile_rows // 8, 8, -1).sum(axis=0)[None]


# ----------------------------------------------------------------------------
# Pass 2: z = sum_p beta_p * E_p as a flat lane-dense combine over [P, N*D].
# Grid = (col_chunks,); beta enters as a tiny resident (P, 1) block.
# ----------------------------------------------------------------------------
def _combine_kernel(beta_ref, e_ref, o_ref):
    # (P, TL) * (P, 1) -> sum over P -> (1, TL); every load/store is 128-lane dense.
    o_ref[...] = jnp.sum(e_ref[...] * beta_ref[...], axis=0, keepdims=True)


def attention_forward(embeds, fc_w, fc_b, att_vec, *, block_rows=2048):
    """embeds: [P, N, D] stacked metapath embeddings; fc_w: [D, D]; fc_b: [D];
    att_vec: [1, D] (or [D]).  Returns z_mp: [N, D] float32."""
    embeds = embeds.astype(jnp.float32)
    P, N, D = embeds.shape

    # Row tiling for pass 1 (multiple of 8; big tiles amortize per-step cost).
    TM = _round_up(min(block_rows, N), 8)
    NT = pl.cdiv(N, TM)

    w_t = fc_w.astype(jnp.float32).T                     # [D_in, D_out]
    b_2d = fc_b.astype(jnp.float32).reshape(1, D)
    att = att_vec.reshape(-1).astype(jnp.float32)

    # ---------------- pass 1: column sums feeding the attention scores ----------------
    sums = pl.pallas_call(
        functools.partial(_score_sum_kernel, tile_rows=TM, n_real=N),
        out_shape=jax.ShapeDtypeStruct((P, 8, D), jnp.float32),
        grid=(P, NT),
        in_specs=[
            pl.BlockSpec((1, TM, D), lambda p, t: (p, t, 0)),   # embedding row tile
            pl.BlockSpec((D, D), lambda p, t: (0, 0)),          # fc weight (pre-T)
            pl.BlockSpec((1, D), lambda p, t: (0, 0)),          # fc bias
        ],
        out_specs=pl.BlockSpec((1, 8, D), lambda p, t: (p, 0, 0)),
        compiler_params=pltpu.CompilerParams(
            # NOTE: P (=3) parallel is 2-vs-1 across v7x's two TCs; acceptable
            # for this small pass, see TODO above for the balanced split.
            dimension_semantics=("parallel", "arbitrary")),
        cost_estimate=pl.CostEstimate(
            flops=2 * P * NT * TM * D * (D + 2),
            transcendentals=P * NT * TM * D,
            bytes_accessed=4 * (P * N * D + D * D + D + P * 8 * D)),
    )(embeds, w_t, b_2d)

    # ---------------- softmax over P scalar scores (plain JAX, tiny) ----------------
    means = sums.sum(axis=1) / jnp.float32(N)            # [P, D]
    beta = jax.nn.softmax(means @ att)                   # [P]
    beta_col = beta.reshape(P, 1).astype(jnp.float32)

    # ---------------- pass 2: flat lane-dense weighted combine ----------------
    L = N * D
    target = max(128, block_rows * D)
    TL = L if L <= target else (target // 128) * 128     # mult of 128 (or full L)
    NTL = pl.cdiv(L, TL)

    emb_flat = embeds.reshape(P, L)                      # free row-major view

    z_flat = pl.pallas_call(
        _combine_kernel,
        out_shape=jax.ShapeDtypeStruct((1, L), jnp.float32),
        grid=(NTL,),
        in_specs=[
            pl.BlockSpec((P, 1), lambda t: (0, 0)),      # beta column (resident)
            pl.BlockSpec((P, TL), lambda t: (0, t)),     # flat embedding chunk
        ],
        out_specs=pl.BlockSpec((1, TL), lambda t: (0, t)),
        compiler_params=pltpu.CompilerParams(dimension_semantics=("parallel",)),
        cost_estimate=pl.CostEstimate(
            flops=2 * P * L,
            transcendentals=0,
            bytes_accessed=4 * ((P + 1) * L + P)),
    )(beta_col, emb_flat)

    return z_flat.reshape(N, D)


def attention_reference(embeds, fc_w, fc_b, att_vec):
    """Pure-JAX reference mirroring the PyTorch Attention.forward (attn_drop=0)."""
    P = embeds.shape[0]
    scores = []
    for i in range(P):
        h = jnp.tanh(jnp.dot(embeds[i], fc_w.T,
                             precision=jax.lax.Precision.HIGHEST) + fc_b)
        scores.append(jnp.dot(att_vec.reshape(-1), h.mean(axis=0)))
    beta = jax.nn.softmax(jnp.stack(scores))
    z = jnp.zeros_like(embeds[0])
    for i in range(P):
        z = z + beta[i] * embeds[i]
    return z


def xavier_normal(key, shape, gain):
    fan_out, fan_in = shape[-2], shape[-1]
    std = gain * jnp.sqrt(2.0 / (fan_in + fan_out))
    return std * jax.random.normal(key, shape, dtype=jnp.float32)


if __name__ == "__main__":
    # Small shapes implied by the module: P metapath embeddings of [N, hidden_dim].
    P, N, D = 3, 200, 32
    key = jax.random.PRNGKey(0)
    k_e, k_w, k_b, k_a = jax.random.split(key, 4)

    embeds = jax.random.normal(k_e, (P, N, D), dtype=jnp.float32)

    gain = 1.414
    fc_w = xavier_normal(k_w, (D, D), gain)                            # fc weight
    bound = 1.0 / (D ** 0.5)
    fc_b = jax.random.uniform(k_b, (D,), jnp.float32, -bound, bound)   # fc bias
    att = xavier_normal(k_a, (1, D), gain)                             # att param

    ref = attention_reference(embeds, fc_w, fc_b, att)

    # Small tiles: exercises multi-tile streaming, last-tile row masking and the
    # flat-combine boundary chunk.
    out_small = jax.block_until_ready(
        attention_forward(embeds, fc_w, fc_b, att, block_rows=64))
    # Default large tiles: single tile per pass.
    out_big = jax.block_until_ready(attention_forward(embeds, fc_w, fc_b, att))

    assert out_small.shape == (N, D) and out_big.shape == (N, D)
    assert jnp.allclose(out_small, ref, atol=2e-3, rtol=2e-3), (
        "Pallas output (small tiles) mismatch vs reference")
    assert jnp.allclose(out_big, ref, atol=2e-3, rtol=2e-3), (
        "Pallas output (default tiles) mismatch vs reference")
    print("KERNEL_OK")
</pallas_src>

<mosaic_0001>
module attributes {stable_mosaic.version = 11 : i64} {
  func.func @_score_sum_kernel(%arg0: i32, %arg1: i32, %arg2: memref<1x64x32xf32, #tpu.memory_space<vmem>>, %arg3: memref<32x32xf32, #tpu.memory_space<vmem>>, %arg4: memref<1x32xf32, #tpu.memory_space<vmem>>, %arg5: memref<1x8x32xf32, #tpu.memory_space<vmem>>) attributes {dimension_semantics = [#tpu.dimension_semantics<parallel>, #tpu.dimension_semantics<arbitrary>], iteration_bounds = array<i64: 3, 4>, scalar_prefetch = 0 : i64, scratch_operands = 0 : i64, tpu.core_type = #tpu.core_type<tc>, window_params = [{transform_indices = @transform_0, window_bounds = array<i64: 1, 64, 32>}, {pipeline_mode = #tpu.pipeline_mode<synchronous>, transform_indices = @transform_1, window_bounds = array<i64: 32, 32>}, {pipeline_mode = #tpu.pipeline_mode<synchronous>, transform_indices = @transform_2, window_bounds = array<i64: 1, 32>}, {transform_indices = @transform_3, window_bounds = array<i64: 1, 8, 32>}]} {
    %c0_i32 = arith.constant 0 : i32
    %0 = arith.cmpi eq, %arg1, %c0_i32 : i32
    %1 = arith.extui %0 : i1 to i32
    %c0_i32_0 = arith.constant 0 : i32
    %2 = arith.cmpi ne, %1, %c0_i32_0 : i32
    scf.if %2 {
      %cst_10 = arith.constant 0.000000e+00 : f32
      %17 = vector.broadcast %cst_10 : f32 to vector<1x8x32xf32>
      %c0_11 = arith.constant 0 : index
      %c0_12 = arith.constant 0 : index
      %c0_13 = arith.constant 0 : index
      %18 = vector.load %arg5[%c0_11, %c0_12, %c0_13] : memref<1x8x32xf32, #tpu.memory_space<vmem>>, vector<1x8x32xf32>
      tpu.vector_store %arg5[%c0_11, %c0_12, %c0_13], %17 {strides = array<i32>} : memref<1x8x32xf32, #tpu.memory_space<vmem>>, vector<1x8x32xf32>,
    } else {
    }
    %c0 = arith.constant 0 : index
    %c0_1 = arith.constant 0 : index
    %c0_2 = arith.constant 0 : index
    %3 = vector.load %arg2[%c0, %c0_1, %c0_2] : memref<1x64x32xf32, #tpu.memory_space<vmem>>, vector<1x64x32xf32>
    %4 = vector.shape_cast %3 : vector<1x64x32xf32> to vector<64x32xf32>
    %c0_3 = arith.constant 0 : index
    %c0_4 = arith.constant 0 : index
    %5 = vector.load %arg3[%c0_3, %c0_4] : memref<32x32xf32, #tpu.memory_space<vmem>>, vector<32x32xf32>
    %cst = arith.constant dense<0.000000e+00> : vector<64x32xf32>
    %6 = tpu.matmul %4, %5, %cst {dimension_numbers = #tpu.dot_dimension_numbers<[1], [0], [0], [1], [0, 0, 1, 1], [], []>} : vector<64x32xf32>, vector<32x32xf32>, vector<64x32xf32> -> vector<64x32xf32>
    %c0_5 = arith.constant 0 : index
    %c0_6 = arith.constant 0 : index
    %7 = vector.load %arg4[%c0_5, %c0_6] : memref<1x32xf32, #tpu.memory_space<vmem>>, vector<1x32xf32>
    %8 = vector.broadcast %7 : vector<1x32xf32> to vector<64x32xf32>
    %9 = arith.addf %6, %8 : vector<64x32xf32>
    %10 = math.tanh %9 : vector<64x32xf32>
    %c3_i32 = arith.constant 3 : i32
    %11 = arith.cmpi slt, %arg1, %c3_i32 : i32
    %12 = arith.extui %11 : i1 to i32
    %c0_i32_7 = arith.constant 0 : i32
    %13 = arith.cmpi ne, %12, %c0_i32_7 : i32
    scf.if %13 {
      %c0_10 = arith.constant 0 : index
      %c0_11 = arith.constant 0 : index
      %c0_12 = arith.constant 0 : index
      %17 = vector.load %arg5[%c0_10, %c0_11, %c0_12] : memref<1x8x32xf32, #tpu.memory_space<vmem>>, vector<1x8x32xf32>
      %18 = vector.shape_cast %10 : vector<64x32xf32> to vector<8x8x32xf32>
      %cst_13 = arith.constant dense<0.000000e+00> : vector<8x32xf32>
      %19 = vector.multi_reduction <add>, %18, %cst_13 [0] : vector<8x8x32xf32> to vector<8x32xf32>
      %20 = vector.shape_cast %19 : vector<8x32xf32> to vector<1x8x32xf32>
      %21 = arith.addf %17, %20 : vector<1x8x32xf32>
      %c0_14 = arith.constant 0 : index
      %c0_15 = arith.constant 0 : index
      %c0_16 = arith.constant 0 : index
      %22 = vector.load %arg5[%c0_14, %c0_15, %c0_16] : memref<1x8x32xf32, #tpu.memory_space<vmem>>, vector<1x8x32xf32>
      tpu.vector_store %arg5[%c0_14, %c0_15, %c0_16], %21 {strides = array<i32>} : memref<1x8x32xf32, #tpu.memory_space<vmem>>, vector<1x8x32xf32>,
    } else {
    }
    %c3_i32_8 = arith.constant 3 : i32
    %14 = arith.cmpi eq, %arg1, %c3_i32_8 : i32
    %15 = arith.extui %14 : i1 to i32
    %c0_i32_9 = arith.constant 0 : i32
    %16 = arith.cmpi ne, %15, %c0_i32_9 : i32
    scf.if %16 {
      %c64_i32 = arith.constant 64 : i32
      %17 = arith.muli %arg1, %c64_i32 : i32
      %18 = tpu.iota {dimensions = array<i32: 0>} : vector<64x32xi32>
      %19 = vector.broadcast %17 : i32 to vector<64x32xi32>
      %20 = arith.addi %19, %18 : vector<64x32xi32>
      %c200_i32 = arith.constant 200 : i32
      %21 = vector.broadcast %c200_i32 : i32 to vector<64x32xi32>
      %22 = arith.cmpi slt, %20, %21 : vector<64x32xi32>
      %cst_10 = arith.constant 0.000000e+00 : f32
      %23 = vector.broadcast %cst_10 : f32 to vector<64x32xf32>
      %24 = arith.select %22, %10, %23 : vector<64x32xi1>, vector<64x32xf32>
      %c0_11 = arith.constant 0 : index
      %c0_12 = arith.constant 0 : index
      %c0_13 = arith.constant 0 : index
      %25 = vector.load %arg5[%c0_11, %c0_12, %c0_13] : memref<1x8x32xf32, #tpu.memory_space<vmem>>, vector<1x8x32xf32>
      %26 = vector.shape_cast %24 : vector<64x32xf32> to vector<8x8x32xf32>
      %cst_14 = arith.constant dense<0.000000e+00> : vector<8x32xf32>
      %27 = vector.multi_reduction <add>, %26, %cst_14 [0] : vector<8x8x32xf32> to vector<8x32xf32>
      %28 = vector.shape_cast %27 : vector<8x32xf32> to vector<1x8x32xf32>
      %29 = arith.addf %25, %28 : vector<1x8x32xf32>
      %c0_15 = arith.constant 0 : index
      %c0_16 = arith.constant 0 : index
      %c0_17 = arith.constant 0 : index
      %30 = vector.load %arg5[%c0_15, %c0_16, %c0_17] : memref<1x8x32xf32, #tpu.memory_space<vmem>>, vector<1x8x32xf32>
      tpu.vector_store %arg5[%c0_15, %c0_16, %c0_17], %29 {strides = array<i32>} : memref<1x8x32xf32, #tpu.memory_space<vmem>>, vector<1x8x32xf32>,
    } else {
    }
    return
  }
  func.func @transform_0(%arg0: i32, %arg1: i32) -> (i32, i32, i32) {
    %c0_i32 = arith.constant 0 : i32
    %c0_i32_0 = arith.constant 0 : i32
    return %arg0, %arg1, %c0_i32 : i32, i32, i32
  }
  func.func @transform_1(%arg0: i32, %arg1: i32) -> (i32, i32) {
    %c0_i32 = arith.constant 0 : i32
    %c0_i32_0 = arith.constant 0 : i32
    %c0_i32_1 = arith.constant 0 : i32
    return %c0_i32, %c0_i32_0 : i32, i32
  }
  func.func @transform_2(%arg0: i32, %arg1: i32) -> (i32, i32) {
    %c0_i32 = arith.constant 0 : i32
    %c0_i32_0 = arith.constant 0 : i32
    %c0_i32_1 = arith.constant 0 : i32
    return %c0_i32, %c0_i32_0 : i32, i32
  }
  func.func @transform_3(%arg0: i32, %arg1: i32) -> (i32, i32, i32) {
    %c0_i32 = arith.constant 0 : i32
    %c0_i32_0 = arith.constant 0 : i32
    %c0_i32_1 = arith.constant 0 : i32
    return %arg0, %c0_i32, %c0_i32_0 : i32, i32, i32
  }
}

</mosaic_0001>

<llo_original>
// kernel: tpu_custom_call.1
$region0: #{tpu_custom_call.1}
  #allocation0 [shape = 'u32[]', space=smem, size = 0x4, offset = 0x4, fixed_abs, tag = 'smem constant byte address 0x4 - core index']
  #allocation1 [shape = 'u32[144,128]{1,0:T(1,128)}', space=vmem, size = 0x12000, scoped, tag = 'internal scratch']
  %s0 = inlined_call_operand.vmem [shape: f32[3,200,32], index: 0, kind: input, shape index: {}]
  %s1 = inlined_call_operand.vmem [shape: f32[32,32], index: 1, kind: input, shape index: {}]
  %s2 = inlined_call_operand.vmem [shape: f32[1,32], index: 2, kind: input, shape index: {}]
  %s3 = inlined_call_operand.hbm [shape: f32[3,8,32], index: 3, kind: output, shape index: {}]
  %s4 = sld [smem:[#allocation0]]
  $region57: #{tpu_custom_call.1} parent=0
    _
  %s6 = ssub.s32 1, %s4
  %s7 = scalar_select 0, %s6, %s4
  $region1: #{tpu_custom_call.1} parent=0
    #allocation2 [shape = 'u8[8192]{0}', space=vmem, size = 0x2000, scoped, tag = 'output window, operand 0']
    #allocation3 [shape = 's32[2]{0}', space=sflag, size = 0x8, scoped, tag = 'scoped memory for tpu_custom_call.1']
    %8 = vsyncpa [#allocation3], 0
    %s9 = scalar_lea.sflag [#allocation3], 1
    %10 = vsyncpa %s9, 0
    loop: start=0, step=1, limit=14
    $region2: #{tpu_custom_call.1} parent=1 // loop_pre_header
      _
    $region3: #{tpu_custom_call.1} parent=1 // loop_header
      %s12 = sphi 0, %s16
      %p13 = scmp.ge.s32.totalorder %s12, 14
      %s19 = sphi 0, %s31
      %s20 = sphi 0, %s27
      %s21 = sphi 0, %s19
      %s22 = sphi 0, %s20
      %s23 = sphi 0, %s21
      %s24 = sphi 0, %s22
      %s36 = sphi 0, %s38
      %s39 = sphi 0, %s36
      %s40 = sphi 0, %s39
      %s56 = sphi 0, %s40
      %s60 = sphi 0, %s60
      %s62 = sphi 0, %s60
      %s63 = sphi 0, %s62
      %s77 = sphi 0, %s63
      %s81 = sphi 0, %s81
      %s83 = sphi 0, %s81
      %s84 = sphi 0, %s83
      %s98 = sphi 0, %s84
      %s104 = sphi 0, %s106
      %s107 = sphi 0, %s104
      %s108 = sphi 0, %s107
      %s124 = sphi 0, %s108
    $region4: #{tpu_custom_call.1} parent=1 // loop_header_branch
      %15 = sbr.rel (%p13) target = $region8
    $region5: #{tpu_custom_call.1} parent=1 // loop_body
      %s17 = ssub.s32 %s12, 1
      %s18 = ssub.s32 %s12, 2
      %s25 = sadd.s32 1, %s20
      %p26 = scmp.ge.s32.totalorder %s25, 4
      %s27 = scalar_select %p26, 0, %s25
      %s28 = sadd.s32 1, %s19
      %s29 = scalar_select %p26, %s28, %s19
      %p30 = scmp.ge.s32.totalorder %s29, 3
      %s31 = scalar_select %p30, 0, %s29
      %s32 = ssub.s32 %s19, %s31
      %s33 = ssub.s32 %s20, %s27
      %s34 = sor.u32 %s32, %s33
      %p35 = scmp.eq.s32.totalorder %s34, 0
      %s37 = sadd.s32 %s36, 1
      %s38 = scalar_select %p35, %s36, %s37
      %p41 = pneg %p35
      %p42 = scmp.eq.s32.totalorder %s12, 11
      %p43 = por %p41, %p42
      %p44 = scmp.ne.s32.totalorder %s36, %s39
      %p45 = scmp.eq.s32.totalorder %s12, 0
      %p46 = por %p44, %p45
      %p47 = scmp.ne.s32.totalorder %s36, %s39
      %p48 = scmp.eq.s32.totalorder %s17, 11
      %p49 = por %p47, %p48
      %p50 = scmp.ne.s32.totalorder %s39, %s40
      %p51 = scmp.eq.s32.totalorder %s17, 0
      %p52 = por %p50, %p51
      %p53 = scmp.ne.s32.totalorder %s39, %s40
      %p54 = scmp.eq.s32.totalorder %s18, 11
      %p55 = por %p53, %p54
      %p57 = scmp.ne.s32.totalorder %s40, %s56
      %p58 = scmp.eq.s32.totalorder %s18, 0
      %p59 = por %p57, %p58
      %s61 = sadd.s32 %s60, 1
      %p64 = scmp.eq.s32.totalorder %s12, 11
      %p65 = scmp.ne.s32.totalorder %s60, %s62
      %p66 = scmp.eq.s32.totalorder %s12, 0
      %p67 = por %p65, %p66
      %p68 = scmp.ne.s32.totalorder %s60, %s62
      %p69 = scmp.eq.s32.totalorder %s17, 11
      %p70 = por %p68, %p69
      %p71 = scmp.ne.s32.totalorder %s62, %s63
      %p72 = scmp.eq.s32.totalorder %s17, 0
      %p73 = por %p71, %p72
      %p74 = scmp.ne.s32.totalorder %s62, %s63
      %p75 = scmp.eq.s32.totalorder %s18, 11
      %p76 = por %p74, %p75
      %p78 = scmp.ne.s32.totalorder %s63, %s77
      %p79 = scmp.eq.s32.totalorder %s18, 0
      %p80 = por %p78, %p79
      %s82 = sadd.s32 %s81, 1
      %p85 = scmp.eq.s32.totalorder %s12, 11
      %p86 = scmp.ne.s32.totalorder %s81, %s83
      %p87 = scmp.eq.s32.totalorder %s12, 0
      %p88 = por %p86, %p87
      %p89 = scmp.ne.s32.totalorder %s81, %s83
      %p90 = scmp.eq.s32.totalorder %s17, 11
      %p91 = por %p89, %p90
      %p92 = scmp.ne.s32.totalorder %s83, %s84
      %p93 = scmp.eq.s32.totalorder %s17, 0
      %p94 = por %p92, %p93
      %p95 = scmp.ne.s32.totalorder %s83, %s84
      %p96 = scmp.eq.s32.totalorder %s18, 11
      %p97 = por %p95, %p96
      %p99 = scmp.ne.s32.totalorder %s84, %s98
      %p100 = scmp.eq.s32.totalorder %s18, 0
      %p101 = por %p99, %p100
      %s102 = ssub.s32 %s19, %s31
      %p103 = scmp.eq.s32.totalorder %s102, 0
      %s105 = sadd.s32 %s104, 1
      %s106 = scalar_select %p103, %s104, %s105
      %p109 = pneg %p103
      %p110 = scmp.eq.s32.totalorder %s12, 11
      %p111 = por %p109, %p110
      %p112 = scmp.ne.s32.totalorder %s104, %s107
      %p113 = scmp.eq.s32.totalorder %s12, 0
      %p114 = por %p112, %p113
      %p115 = scmp.ne.s32.totalorder %s104, %s107
      %p116 = scmp.eq.s32.totalorder %s17, 11
      %p117 = por %p115, %p116
      %p118 = scmp.ne.s32.totalorder %s107, %s108
      %p119 = scmp.eq.s32.totalorder %s17, 0
      %p120 = por %p118, %p119
      %p121 = scmp.ne.s32.totalorder %s107, %s108
      %p122 = scmp.eq.s32.totalorder %s18, 11
      %p123 = por %p121, %p122
      %p125 = scmp.ne.s32.totalorder %s108, %s124
      %p126 = scmp.eq.s32.totalorder %s18, 0
      %p127 = por %p125, %p126
      %p128 = scmp.le.s32.totalorder 1, %s12
      %p129 = scmp.lt.s32.totalorder %s12, 13
      %p130 = pnand %p128, %p129
      %p131 = pneg %p130
      // Predicated region
      $region9: #{tpu_custom_call.1} parent=5 // pred_check
        _
      $region10: #{tpu_custom_call.1} parent=5 // pred_check_branch
        %133 = sbr.rel (%p130) target = $region12
      $region11: #{tpu_custom_call.1} parent=5 // pred_region
        %s134 = ssub.s32 %s12, 1
        // Predicated region
        $region13: #{tpu_custom_call.1} parent=11 // pred_check
          %p135 = pneg %p73
        $region14: #{tpu_custom_call.1} parent=11 // pred_check_branch
          %137 = sbr.rel (%p135) target = $region16
        $region15: #{tpu_custom_call.1} parent=11 // pred_region
          _
        $region16: #{tpu_custom_call.1} parent=11 // pred_fallthru
          _
        // Predicated region
        $region17: #{tpu_custom_call.1} parent=11 // pred_check
          %p138 = pneg %p94
        $region18: #{tpu_custom_call.1} parent=11 // pred_check_branch
          %140 = sbr.rel (%p138) target = $region20
        $region19: #{tpu_custom_call.1} parent=11 // pred_region
          _
        $region20: #{tpu_custom_call.1} parent=11 // pred_fallthru
          _
      $region12: #{tpu_custom_call.1} parent=5 // pred_fallthru
        _
      %p141 = scmp.lt.s32.totalorder %s12, 12
      // Predicated region
      $region21: #{tpu_custom_call.1} parent=5 // pred_check
        %p142 = pneg %p141
      $region22: #{tpu_custom_call.1} parent=5 // pred_check_branch
        %144 = sbr.rel (%p142) target = $region24
      $region23: #{tpu_custom_call.1} parent=5 // pred_region
        // Predicated region
        $region25: #{tpu_custom_call.1} parent=23 // pred_check
          %p145 = pneg %p46
        $region26: #{tpu_custom_call.1} parent=23 // pred_check_branch
          %147 = sbr.rel (%p145) target = $region28
        $region27: #{tpu_custom_call.1} parent=23 // pred_region
          %s148 = smul.u32 8, %s20
          %s149 = ssub.s32 25, %s148
          %p150 = scmp.lt.s32.totalorder %s149, 8
          %s151 = scalar_select %p150, %s149, 8
          %s152 = smul.u32 128, %s151
          %p153 = scmp.lt.s32.totalorder %s19, 2
          %s154 = scalar_select %p153, %s19, 2
          %p155 = scmp.lt.s32.totalorder %s148, 24
          %s156 = scalar_select %p155, %s148, 24
          %s157 = smul.addr %s154, 25
          %s158 = sadd.s32 %s156, %s157
          %s159 = smul.addr %s158, 8
          %s160 = scalar_lea.vmem %s0, %s159
          %s161 = smul.u32 8, %s20
          %s162 = ssub.s32 25, %s161
          %p163 = scmp.lt.s32.totalorder %s162, 8
          %s164 = scalar_select %p163, %s162, 8
          %s165 = smul.u32 128, %s164
        $region28: #{tpu_custom_call.1} parent=23 // pred_fallthru
          _
      $region24: #{tpu_custom_call.1} parent=5 // pred_fallthru
        _
      %p166 = scmp.le.s32.totalorder 1, %s12
      %p167 = scmp.lt.s32.totalorder %s12, 13
      %p168 = pnand %p166, %p167
      %p169 = pneg %p168
      // Predicated region
      $region29: #{tpu_custom_call.1} parent=5 // pred_check
        _
      $region30: #{tpu_custom_call.1} parent=5 // pred_check_branch
        %171 = sbr.rel (%p168) target = $region32
      $region31: #{tpu_custom_call.1} parent=5 // pred_region
        %s172 = ssub.s32 %s12, 1
        %s173 = smul.u32 8, %s22
        %s174 = ssub.s32 25, %s173
        %p175 = scmp.lt.s32.totalorder %s174, 8
        %s176 = scalar_select %p175, %s174, 8
        %s177 = smul.u32 128, %s176
        %p178 = scmp.lt.s32.totalorder %s21, 2
        %s179 = scalar_select %p178, %s21, 2
        %p180 = scmp.lt.s32.totalorder %s173, 24
        %s181 = scalar_select %p180, %s173, 24
        %s182 = smul.addr %s179, 25
        %s183 = sadd.s32 %s181, %s182
        %s184 = smul.addr %s183, 8
        %s185 = scalar_lea.vmem %s0, %s184
        %p186 = pneg %p52
        %p187 = pneg %p49
        %p188 = pneg %p73
        %p189 = pneg %p70
        %p190 = pneg %p94
        %p191 = pneg %p91
        %p192 = pneg %p120
        %p193 = pneg %p117
        %s194 = sand.u32 %s107, 1
        %s195 = scalar_lea.sflag [#allocation3], %s194
        %s196 = sand.u32 %s107, 1
        %s197 = smul.addr %s196, 8
        %s198 = scalar_lea.vmem [#allocation2], %s197
        %s199 = smul.u32 8, %s22
        %s200 = ssub.s32 25, %s199
        %p201 = scmp.lt.s32.totalorder %s200, 8
        %s202 = scalar_select %p201, %s200, 8
        %s203 = smul.u32 128, %s202
        %p204 = scmp.lt.s32.totalorder %s21, 2
        %s205 = scalar_select %p204, %s21, 2
        %p206 = scmp.lt.s32.totalorder %s199, 24
        %s207 = scalar_select %p206, %s199, 24
        %s208 = smul.addr %s205, 25
        %s209 = sadd.s32 %s207, %s208
        %s210 = smul.addr %s209, 8
        %s211 = scalar_lea.vmem %s0, %s210
        %s212 = smul.u32 8, %s22
        %s213 = ssub.s32 25, %s212
        %p214 = scmp.lt.s32.totalorder %s213, 8
        %s215 = scalar_select %p214, %s213, 8
        %s216 = smul.u32 128, %s215
        %p217 = scmp.eq.s32.totalorder %s22, 0
        // Predicated region
        $region33: #{tpu_custom_call.1} parent=31 // pred_check
          %p218 = pneg %p217
        $region34: #{tpu_custom_call.1} parent=31 // pred_check_branch
          %220 = sbr.rel (%p218) target = $region36
        $region35: #{tpu_custom_call.1} parent=31 // pred_region
          %vm221 = vcmask 261120
          %222 = vst.msk [vmem:[%s198] sm:$0xff] %vm221, 0.0
        $region36: #{tpu_custom_call.1} parent=31 // pred_fallthru
          _
        %v223 = vld [vmem:[%s211] sm:$0xff]
        %v224 = vld [vmem:[%s211 + $0x8] sm:$0xff]
        %v225 = vld [vmem:[%s211 + $0x10] sm:$0xff]
        %v226 = vld [vmem:[%s211 + $0x18] sm:$0xff]
        %v227 = vld [vmem:[%s211 + $0x20] sm:$0xff]
        %v228 = vld [vmem:[%s211 + $0x28] sm:$0xff]
        %v229 = vld [vmem:[%s211 + $0x30] sm:$0xff]
        %v230 = vld [vmem:[%s211 + $0x38] sm:$0xff]
        %v231 = vld [vmem:[%s1] sm:$0xff]
        %v232 = vld [vmem:[%s1 + $0x8] sm:$0xff]
        %v233 = vld [vmem:[%s1 + $0x10] sm:$0xff]
        %v234 = vld [vmem:[%s1 + $0x18] sm:$0xff]
        %v235 = vld [vmem:[%s2] sm:$0x1]
        %v237 = vlaneseq
        %v238 = vshrl.u32 %v237, 7
        %v239 = vsub.s32 0, %v238
        %v240 = vrot.slane %v235, %v239
        %vm242 = vcmask 261120
        %v244 = vsel %vm242, %v223, 0
        %v247 = vsel %vm242, %v224, 0
        %v250 = vsel %vm242, %v225, 0
        %v253 = vsel %vm242, %v226, 0
        %v256 = vsel %vm242, %v227, 0
        %v259 = vsel %vm242, %v228, 0
        %v262 = vsel %vm242, %v229, 0
        %v265 = vsel %vm242, %v230, 0
        %267 = vmatprep.subr.mxu0 0.0
        %268 = vmatpush1.msra.mxu0 %v231
        %269 = vmatprep.subr.mxu0 0.0
        %270 = vmatpush1.msra.mxu0 %v232
        %271 = vmatprep.subr.mxu0 0.0
        %272 = vmatpush1.msra.mxu0 %v233
        %273 = vmatprep.subr.mxu0 0.0
        %274 = vmatpush1.msra.mxu0 %v234
        %275 = vmatprep.subr.mxu0 0.0
        %276 = vmatpush1.msra.mxu0 0.0
        %277 = vmatprep.subr.mxu0 0.0
        %278 = vmatpush1.msra.mxu0 0.0
        %279 = vmatprep.subr.mxu0 0.0
        %280 = vmatpush1.msra.mxu0 0.0
        %281 = vmatprep.subr.mxu0 0.0
        %282 = vmatpush1.msra.mxu0 0.0
        %283 = vmatprep.subr.mxu0 0.0
        %284 = vmatpush1.msra.mxu0 0.0
        %285 = vmatprep.subr.mxu0 0.0
        %286 = vmatpush1.msra.mxu0 0.0
        %287 = vmatprep.subr.mxu0 0.0
        %288 = vmatpush1.msra.mxu0 0.0
        %289 = vmatprep.subr.mxu0 0.0
        %290 = vmatpush1.msra.mxu0 0.0
        %291 = vmatprep.subr.mxu0 0.0
        %292 = vmatpush1.msra.mxu0 0.0
        %293 = vmatprep.subr.mxu0 0.0
        %294 = vmatpush1.msra.mxu0 0.0
        %295 = vmatprep.subr.mxu0 0.0
        %296 = vmatpush1.msra.mxu0 0.0
        %297 = vmatprep.subr.mxu0 0.0
        %298 = vmatpush1.msra.mxu0 0.0
        %299 = vmatprep.subr.mxu0 0.0
        %300 = vmatpush1.msra.mxu0 0.0
        %301 = vmatprep.subr.mxu0 0.0
        %302 = vmatpush1.msra.mxu0 0.0
        %303 = vmatprep.subr.mxu0 0.0
        %304 = vmatpush1.msra.mxu0 0.0
        %305 = vmatprep.subr.mxu0 0.0
        %306 = vmatpush1.msra.mxu0 0.0
        %307 = vmatprep.subr.mxu0 0.0
        %308 = vmatpush1.msra.mxu0 0.0
        %309 = vmatprep.subr.mxu0 0.0
        %310 = vmatpush1.msra.mxu0 0.0
        %311 = vmatprep.subr.mxu0 0.0
        %312 = vmatpush1.msra.mxu0 0.0
        %313 = vmatprep.subr.mxu0 0.0
        %314 = vmatpush1.msra.mxu0 0.0
        %315 = vmatprep.subr.mxu0 0.0
        %316 = vmatpush1.msra.mxu0 0.0
        %317 = vmatprep.subr.mxu0 0.0
        %318 = vmatpush1.msra.mxu0 0.0
        %319 = vmatprep.subr.mxu0 0.0
        %320 = vmatpush1.msra.mxu0 0.0
        %321 = vmatprep.subr.mxu0 0.0
        %322 = vmatpush1.msra.mxu0 0.0
        %323 = vmatprep.subr.mxu0 0.0
        %324 = vmatpush1.msra.mxu0 0.0
        %325 = vmatprep.subr.mxu0 0.0
        %326 = vmatpush1.msra.mxu0 0.0
        %327 = vmatprep.subr.mxu0 0.0
        %328 = vmatpush1.msra.mxu0 0.0
        %329 = vmatprep.subr.mxu0 0.0
        %330 = vmatpush1.msra.mxu0 0.0
        %331 = vmatprep.mubr.f32.mxu0 0.0
        %332 = vmatmul.mubr.f32.gmra.mrb[0].mxu0 %v244
        %v333 = vpop.f32.mrb[0].mxu0
        %v334 = vadd.f32 %v240, %v333
        %v335 = vpop.f32.mrb[0].mxu0
        %336 = vmatprep.mubr.f32.mxu0 0.0
        %337 = vmatmul.mubr.f32.gmra.mrb[0].mxu0 %v247
        %v338 = vpop.f32.mrb[0].mxu0
        %v339 = vadd.f32 %v240, %v338
        %v340 = vpop.f32.mrb[0].mxu0
        %341 = vmatprep.mubr.f32.mxu0 0.0
        %342 = vmatmul.mubr.f32.gmra.mrb[0].mxu0 %v250
        %v343 = vpop.f32.mrb[0].mxu0
        %v344 = vadd.f32 %v240, %v343
        %v345 = vpop.f32.mrb[0].mxu0
        %346 = vmatprep.mubr.f32.mxu0 0.0
        %347 = vmatmul.mubr.f32.gmra.mrb[0].mxu0 %v253
        %v348 = vpop.f32.mrb[0].mxu0
        %v349 = vadd.f32 %v240, %v348
        %v350 = vpop.f32.mrb[0].mxu0
        %351 = vmatprep.mubr.f32.mxu0 0.0
        %352 = vmatmul.mubr.f32.gmra.mrb[0].mxu0 %v256
        %v353 = vpop.f32.mrb[0].mxu0
        %v354 = vadd.f32 %v240, %v353
        %v355 = vpop.f32.mrb[0].mxu0
        %356 = vmatprep.mubr.f32.mxu0 0.0
        %357 = vmatmul.mubr.f32.gmra.mrb[0].mxu0 %v259
        %v358 = vpop.f32.mrb[0].mxu0
        %v359 = vadd.f32 %v240, %v358
        %v360 = vpop.f32.mrb[0].mxu0
        %361 = vmatprep.mubr.f32.mxu0 0.0
        %362 = vmatmul.mubr.f32.gmra.mrb[0].mxu0 %v262
        %v363 = vpop.f32.mrb[0].mxu0
        %v364 = vadd.f32 %v240, %v363
        %v365 = vpop.f32.mrb[0].mxu0
        %366 = vmatprep.mubr.f32.mxu0 0.0
        %367 = vmatmul.mubr.f32.gmra.mrb[0].mxu0 %v265
        %v368 = vpop.f32.mrb[0].mxu0
        %v369 = vadd.f32 %v240, %v368
        %v370 = vpop.f32.mrb[0].mxu0
        %371 = vdwg.mxu0
        %v372 = vtanh.pop %v334
        %v373 = vtanh.pop %v339
        %v374 = vtanh.pop %v344
        %v375 = vtanh.pop %v349
        %v376 = vtanh.pop %v354
        %v377 = vtanh.pop %v359
        %v378 = vtanh.pop %v364
        %v379 = vtanh.pop %v369
        %p380 = scmp.lt.s32.totalorder %s22, 3
        // Predicated region
        $region37: #{tpu_custom_call.1} parent=31 // pred_check
          %p381 = pneg %p380
        $region38: #{tpu_custom_call.1} parent=31 // pred_check_branch
          %383 = sbr.rel (%p381) target = $region40
        $region39: #{tpu_custom_call.1} parent=31 // pred_region
          %v384 = vld [vmem:[%s198] sm:$0xff]
          %v385 = vsel %vm242, %v372, 0.0
          %v386 = vsel %vm242, %v373, 0.0
          %v387 = vadd.f32 %v385, %v386
          %v388 = vsel %vm242, %v374, 0.0
          %v389 = vadd.f32 %v387, %v388
          %v390 = vsel %vm242, %v375, 0.0
          %v391 = vadd.f32 %v389, %v390
          %v392 = vsel %vm242, %v376, 0.0
          %v393 = vadd.f32 %v391, %v392
          %v394 = vsel %vm242, %v377, 0.0
          %v395 = vadd.f32 %v393, %v394
          %v396 = vsel %vm242, %v378, 0.0
          %v397 = vadd.f32 %v395, %v396
          %v398 = vsel %vm242, %v379, 0.0
          %v399 = vadd.f32 %v397, %v398
          %v400 = vadd.f32 %v384, %v399
          %401 = vst.msk [vmem:[%s198] sm:$0xff] %vm242, %v400
        $region40: #{tpu_custom_call.1} parent=31 // pred_fallthru
          _
        %p402 = scmp.eq.s32.totalorder %s22, 3
        // Predicated region
        $region41: #{tpu_custom_call.1} parent=31 // pred_check
          %p403 = pneg %p402
        $region42: #{tpu_custom_call.1} parent=31 // pred_check_branch
          %405 = sbr.rel (%p403) target = $region44
        $region43: #{tpu_custom_call.1} parent=31 // pred_region
          %s406 = smul.u32 %s22, 64
          %v407 = vlaneseq
          %v408 = vshrl.u32 %v407, 7
          %v409 = vadd.s32 %v408, 8
          %v410 = vadd.s32 %v408, 16
          %v411 = vadd.s32 %v408, 24
          %v412 = vadd.s32 %v408, 32
          %v413 = vadd.s32 %v408, 40
          %v414 = vadd.s32 %v408, 48
          %v415 = vadd.s32 %v408, 56
          %v416 = vstv %s406
          %v417 = vadd.s32 %v416, %v408
          %v418 = vadd.s32 %v416, %v409
          %v419 = vadd.s32 %v416, %v410
          %v420 = vadd.s32 %v416, %v411
          %v421 = vadd.s32 %v416, %v412
          %v422 = vadd.s32 %v416, %v413
          %v423 = vadd.s32 %v416, %v414
          %v424 = vadd.s32 %v416, %v415
          %vm425 = vcmp.lt.s32.totalorder %v417, 200
          %vm426 = vcmp.lt.s32.totalorder %v418, 200
          %vm427 = vcmp.lt.s32.totalorder %v419, 200
          %vm428 = vcmp.lt.s32.totalorder %v420, 200
          %vm429 = vcmp.lt.s32.totalorder %v421, 200
          %vm430 = vcmp.lt.s32.totalorder %v422, 200
          %vm431 = vcmp.lt.s32.totalorder %v423, 200
          %vm432 = vcmp.lt.s32.totalorder %v424, 200
          %v433 = vsel %vm425, %v372, 0.0
          %v434 = vsel %vm426, %v373, 0.0
          %v435 = vsel %vm427, %v374, 0.0
          %v436 = vsel %vm428, %v375, 0.0
          %v437 = vsel %vm429, %v376, 0.0
          %v438 = vsel %vm430, %v377, 0.0
          %v439 = vsel %vm431, %v378, 0.0
          %v440 = vsel %vm432, %v379, 0.0
          %v441 = vld [vmem:[%s198] sm:$0xff]
          %v442 = vsel %vm242, %v433, 0.0
          %v443 = vsel %vm242, %v434, 0.0
          %v444 = vadd.f32 %v442, %v443
          %v445 = vsel %vm242, %v435, 0.0
          %v446 = vadd.f32 %v444, %v445
          %v447 = vsel %vm242, %v436, 0.0
          %v448 = vadd.f32 %v446, %v447
          %v449 = vsel %vm242, %v437, 0.0
          %v450 = vadd.f32 %v448, %v449
          %v451 = vsel %vm242, %v438, 0.0
          %v452 = vadd.f32 %v450, %v451
          %v453 = vsel %vm242, %v439, 0.0
          %v454 = vadd.f32 %v452, %v453
          %v455 = vsel %vm242, %v440, 0.0
          %v456 = vadd.f32 %v454, %v455
          %v457 = vadd.f32 %v441, %v456
          %458 = vst.msk [vmem:[%s198] sm:$0xff] %vm242, %v457
        $region44: #{tpu_custom_call.1} parent=31 // pred_fallthru
          _
        %s459 = sand.u32 %s107, 1
        %s460 = scalar_lea.sflag [#allocation3], %s459
        %s461 = sand.u32 %s107, 1
        %s462 = smul.addr %s461, 8
        %s463 = scalar_lea.vmem [#allocation2], %s462
        // Predicated region
        $region45: #{tpu_custom_call.1} parent=31 // pred_check
          %p464 = pneg %p117
        $region46: #{tpu_custom_call.1} parent=31 // pred_check_branch
          %466 = sbr.rel (%p464) target = $region48
        $region47: #{tpu_custom_call.1} parent=31 // pred_region
          %s468 = ssub.s32 128, 128
          %469 = vsyncadd %s460, %s468
          %s470 = smul.addr %s21, 128
          %s471 = scalar_lea.hbm %s3, %s470
          %s473 = sshll.u32 %s463, 4
          %s474 = int_to_ptr.vmem [resolvable:$true] %s473
          %476 = dma.vmem_to_hbm [thread:$0]  %s474, 128, %s471, %s460
        $region48: #{tpu_custom_call.1} parent=31 // pred_fallthru
          _
      $region32: #{tpu_custom_call.1} parent=5 // pred_fallthru
        _
      %p477 = scmp.le.s32.totalorder 2, %s12
      // Predicated region
      $region49: #{tpu_custom_call.1} parent=5 // pred_check
        %p478 = pneg %p477
      $region50: #{tpu_custom_call.1} parent=5 // pred_check_branch
        %480 = sbr.rel (%p478) target = $region52
      $region51: #{tpu_custom_call.1} parent=5 // pred_region
        %s481 = ssub.s32 %s12, 2
        // Predicated region
        $region53: #{tpu_custom_call.1} parent=51 // pred_check
          %p482 = pneg %p123
        $region54: #{tpu_custom_call.1} parent=51 // pred_check_branch
          %484 = sbr.rel (%p482) target = $region56
        $region55: #{tpu_custom_call.1} parent=51 // pred_region
          %s485 = sand.u32 %s108, 1
          %s486 = scalar_lea.sflag [#allocation3], %s485
          %s487 = sand.u32 %s108, 1
          %s488 = smul.addr %s487, 8
          %s489 = scalar_lea.vmem [#allocation2], %s488
          %490 = dma.done %s486, 128
        $region56: #{tpu_custom_call.1} parent=51 // pred_fallthru
          _
      $region52: #{tpu_custom_call.1} parent=5 // pred_fallthru
        _
    $region6: #{tpu_custom_call.1} parent=1 // loop_footer
      %s16 = sadd.s32 1, %s12
    $region7: #{tpu_custom_call.1} parent=1 // loop_footer_branch
      %11 = sbr.rel target = $region3
    $region8: #{tpu_custom_call.1} parent=1 // loop_exit
      _
    %491 = vsyncpa [#allocation3], 1
    %s492 = scalar_lea.sflag [#allocation3], 1
    %493 = vsyncpa %s492, 1

</llo_original>
